<compile_context>
chip_gen: v7x
topology: tpu7x:2x2x1
jax: 0.10.0
libtpu: 0.0.40
codegen_flags: <defaults>
</compile_context>

<pallas_src>
import math
import functools

import jax
import jax.numpy as jnp
from jax.experimental import pallas as pl
from jax.experimental.pallas import tpu as pltpu


# ---------------------------------------------------------------------------
# "init": build the sinusoidal positional-encoding buffer (plain JAX, one-time).
# ---------------------------------------------------------------------------
def make_positional_encoding(max_sequence_length, embedding_size, dtype=jnp.float32):
    position = jnp.arange(0, max_sequence_length, dtype=jnp.float32)[:, None]
    div_term = jnp.exp(
        jnp.arange(0, embedding_size, 2, dtype=jnp.float32)
        * (-math.log(10000.0) / embedding_size)
    )
    pe = jnp.zeros((max_sequence_length, embedding_size), dtype=jnp.float32)
    pe = pe.at[:, 0::2].set(jnp.sin(position * div_term))
    pe = pe.at[:, 1::2].set(jnp.cos(position * div_term))
    return pe.astype(dtype)


# ---------------------------------------------------------------------------
# Kernels
# ---------------------------------------------------------------------------
def _pe_add_kernel(x_ref, pe_ref, o_ref):
    # Eval / p==0 path: pure streaming add in the output dtype.
    o_ref[...] = x_ref[...] + pe_ref[...].astype(o_ref.dtype)


def _pe_add_dropout_kernel(x_ref, pe_ref, bits_ref, o_ref, *, keep_threshold, inv_keep):
    y = x_ref[...].astype(jnp.float32) + pe_ref[...].astype(jnp.float32)
    # Inverted dropout: drop iff bits < threshold (threshold = round(p * 2^32)).
    keep = bits_ref[...] >= jnp.uint32(keep_threshold)
    scale = jnp.where(keep, jnp.float32(inv_keep), jnp.float32(0.0))
    o_ref[...] = (y * scale).astype(o_ref.dtype)


# ---------------------------------------------------------------------------
# Wrapper
# ---------------------------------------------------------------------------
def _pick_tile_rows(seq_len):
    # ~512-row tiles (multiple of 8 for f32 / 16 for bf16) give near-roofline
    # pipelining for this mem-bound elementwise kernel; small inputs use one tile.
    if seq_len <= 512:
        return seq_len
    return 512


def positional_encoding_forward(x, pe, *, p, training, rng_key=None):
    """x: [seq_len, emb]; pe: full PE table [max_len, emb] (rows indexed in-kernel)."""
    seq_len, emb = x.shape
    assert pe.shape[0] >= seq_len and pe.shape[1] == emb

    tile_s = _pick_tile_rows(seq_len)
    grid = (pl.cdiv(seq_len, tile_s),)

    def row_spec():
        # Same (i, 0) map works for x, pe, bits and out: PE rows align with x rows.
        return pl.BlockSpec((tile_s, emb), lambda i: (i, 0))

    cparams = pltpu.CompilerParams(dimension_semantics=("parallel",))
    out_shape = jax.ShapeDtypeStruct((seq_len, emb), x.dtype)

    if training and p > 0.0:
        if rng_key is None:
            raise ValueError("rng_key required when training with dropout p > 0")
        bits = jax.random.bits(rng_key, (seq_len, emb), dtype=jnp.uint32)
        keep_threshold = min(int(round(p * (1 << 32))), (1 << 32) - 1)
        kernel = functools.partial(
            _pe_add_dropout_kernel,
            keep_threshold=keep_threshold,
            inv_keep=1.0 / (1.0 - p),
        )
        return pl.pallas_call(
            kernel,
            out_shape=out_shape,
            grid=grid,
            in_specs=[row_spec(), row_spec(), row_spec()],
            out_specs=row_spec(),
            compiler_params=cparams,
        )(x, pe, bits)

    return pl.pallas_call(
        _pe_add_kernel,
        out_shape=out_shape,
        grid=grid,
        in_specs=[row_spec(), row_spec()],
        out_specs=row_spec(),
        compiler_params=cparams,
    )(x, pe)


# ---------------------------------------------------------------------------
# Demo / correctness check
# ---------------------------------------------------------------------------
if __name__ == "__main__":
    embedding_size = 32
    seq_len = 8
    dropout_p = 0.1
    max_sequence_length = 5000

    key = jax.random.PRNGKey(0)
    x_key, drop_key = jax.random.split(key)
    x = jax.random.normal(x_key, (seq_len, embedding_size), dtype=jnp.float32)

    pe = make_positional_encoding(max_sequence_length, embedding_size)
    ref_eval = x + pe[:seq_len, :]

    # Eval mode (dropout is identity) -- deterministic, checked vs. reference.
    out_eval = positional_encoding_forward(x, pe, p=dropout_p, training=False)
    out_eval = jax.block_until_ready(out_eval)
    assert out_eval.shape == (seq_len, embedding_size)
    assert jnp.allclose(out_eval, ref_eval, atol=1e-6), "eval-mode mismatch"

    # Train mode -- exercises the dropout path.
    out_train = positional_encoding_forward(
        x, pe, p=dropout_p, training=True, rng_key=drop_key
    )
    out_train = jax.block_until_ready(out_train)
    # Dropped elements are exactly zero; kept elements are (x + pe) / (1 - p).
    kept = out_train != 0.0
    assert jnp.allclose(
        jnp.where(kept, out_train, 0.0),
        jnp.where(kept, ref_eval / (1.0 - dropout_p), 0.0),
        atol=1e-5,
    ), "train-mode dropout scaling mismatch"

    print("KERNEL_OK")
</pallas_src>

<mosaic_0001>
module attributes {stable_mosaic.version = 11 : i64} {
  func.func @_pe_add_kernel(%arg0: i32, %arg1: memref<8x32xf32, #tpu.memory_space<vmem>>, %arg2: memref<8x32xf32, #tpu.memory_space<vmem>>, %arg3: memref<8x32xf32, #tpu.memory_space<vmem>>) attributes {dimension_semantics = [#tpu.dimension_semantics<parallel>], iteration_bounds = array<i64: 1>, scalar_prefetch = 0 : i64, scratch_operands = 0 : i64, tpu.core_type = #tpu.core_type<tc>, window_params = [{transform_indices = @transform_0, window_bounds = array<i64: 8, 32>}, {transform_indices = @transform_1, window_bounds = array<i64: 8, 32>}, {transform_indices = @transform_2, window_bounds = array<i64: 8, 32>}]} {
    %c0 = arith.constant 0 : index
    %c0_0 = arith.constant 0 : index
    %0 = vector.load %arg1[%c0, %c0_0] : memref<8x32xf32, #tpu.memory_space<vmem>>, vector<8x32xf32>
    %c0_1 = arith.constant 0 : index
    %c0_2 = arith.constant 0 : index
    %1 = vector.load %arg2[%c0_1, %c0_2] : memref<8x32xf32, #tpu.memory_space<vmem>>, vector<8x32xf32>
    %2 = arith.addf %0, %1 : vector<8x32xf32>
    %c0_3 = arith.constant 0 : index
    %c0_4 = arith.constant 0 : index
    %3 = vector.load %arg3[%c0_3, %c0_4] : memref<8x32xf32, #tpu.memory_space<vmem>>, vector<8x32xf32>
    tpu.vector_store %arg3[%c0_3, %c0_4], %2 {strides = array<i32>} : memref<8x32xf32, #tpu.memory_space<vmem>>, vector<8x32xf32>,
    return
  }
  func.func @transform_0(%arg0: i32) -> (i32, i32) {
    %c0_i32 = arith.constant 0 : i32
    %c0_i32_0 = arith.constant 0 : i32
    return %arg0, %c0_i32 : i32, i32
  }
  func.func @transform_1(%arg0: i32) -> (i32, i32) {
    %c0_i32 = arith.constant 0 : i32
    %c0_i32_0 = arith.constant 0 : i32
    return %arg0, %c0_i32 : i32, i32
  }
  func.func @transform_2(%arg0: i32) -> (i32, i32) {
    %c0_i32 = arith.constant 0 : i32
    %c0_i32_0 = arith.constant 0 : i32
    return %arg0, %c0_i32 : i32, i32
  }
}

</mosaic_0001>

<llo_original>
// kernel: tpu_custom_call.1
$region0: #{tpu_custom_call.1}
  #allocation0 [shape = 'u32[]', space=smem, size = 0x4, offset = 0x4, fixed_abs, tag = 'smem constant byte address 0x4 - core index']
  #allocation1 [shape = 'u32[144,128]{1,0:T(1,128)}', space=vmem, size = 0x12000, scoped, tag = 'internal scratch']
  %s0 = inlined_call_operand.vmem [shape: f32[8,32], index: 0, kind: input, shape index: {}]
  %s1 = inlined_call_operand.vmem [shape: f32[5000,32], index: 1, kind: input, shape index: {}]
  %s2 = inlined_call_operand.hbm [shape: f32[8,32], index: 2, kind: output, shape index: {}]
  %s3 = sld [smem:[#allocation0]]
  $region18: #{tpu_custom_call.1} parent=0
    _
  %s5 = ssub.s32 1, %s3
  %s6 = scalar_select 0, %s5, %s3
  $region1: #{tpu_custom_call.1} parent=0
    #allocation2 [shape = 'u8[4096]{0}', space=vmem, size = 0x1000, scoped, tag = 'output window, operand 0, single buffered']
    #allocation3 [shape = 's32[1]{0}', space=sflag, size = 0x4, scoped, tag = 'scoped memory for tpu_custom_call.1']
    %7 = vsyncpa [#allocation3], 0
    // Predicated region
    $region2: #{tpu_custom_call.1} parent=1 // pred_check
      _
    $region3: #{tpu_custom_call.1} parent=1 // pred_check_branch
      %9 = sbr.rel (0) target = $region5
    $region4: #{tpu_custom_call.1} parent=1 // pred_region
      _
    $region5: #{tpu_custom_call.1} parent=1 // pred_fallthru
      _
    // Predicated region
    $region6: #{tpu_custom_call.1} parent=1 // pred_check
      _
    $region7: #{tpu_custom_call.1} parent=1 // pred_check_branch
      %11 = sbr.rel (0) target = $region9
    $region8: #{tpu_custom_call.1} parent=1 // pred_region
      _
    $region9: #{tpu_custom_call.1} parent=1 // pred_fallthru
      _
    %v12 = vld [vmem:[%s0] sm:$0xff]
    %v13 = vld [vmem:[%s1] sm:$0xff]
    %v14 = vadd.f32 %v12, %v13
    %vm15 = vcmask 261120
    %16 = vst.msk [vmem:[#allocation2] sm:$0xff] %vm15, %v14
    // Predicated region
    $region10: #{tpu_custom_call.1} parent=1 // pred_check
      _
    $region11: #{tpu_custom_call.1} parent=1 // pred_check_branch
      %18 = sbr.rel (0) target = $region13
    $region12: #{tpu_custom_call.1} parent=1 // pred_region
      %s20 = ssub.s32 128, 128
      %21 = vsyncadd [#allocation3], %s20
      %s23 = sshll.u32 [#allocation2], 4
      %s24 = int_to_ptr.vmem [resolvable:$true] %s23
      %26 = dma.vmem_to_hbm [thread:$0]  %s24, 128, %s2, [#allocation3]
    $region13: #{tpu_custom_call.1} parent=1 // pred_fallthru
      _
    // Predicated region
    $region14: #{tpu_custom_call.1} parent=1 // pred_check
      _
    $region15: #{tpu_custom_call.1} parent=1 // pred_check_branch
      %28 = sbr.rel (0) target = $region17
    $region16: #{tpu_custom_call.1} parent=1 // pred_region
      %29 = dma.done [#allocation3], 128
    $region17: #{tpu_custom_call.1} parent=1 // pred_fallthru
      _
    %30 = vsyncpa [#allocation3], 1

</llo_original>
